<compile_context>
chip_gen: v5e
topology: v5e:2x2
jax: 0.10.0
libtpu: 0.0.40
codegen_flags: <defaults>
</compile_context>

<pallas_src>
import functools

import jax
import jax.numpy as jnp
from jax.experimental import pallas as pl
from jax.experimental.pallas import tpu as pltpu

_EPS = 1e-12


def _round_up(a, m):
    return (a + m - 1) // m * m


def _pad2(x, shape):
    return jnp.pad(x, [(0, t - s) for s, t in zip(x.shape, shape)])


# --------------------------------------------------------------------------
# One-time parameter prep kernel (grid over N tiles).
# --------------------------------------------------------------------------
def _param_prep_kernel(weight_ref, center_ref, bias_ref, scale_ref,
                       wgate_ref, cnorm_ref, sbeta_ref,
                       *, beta, pow_weight):
    # Feature gate: relu(weight)**pow_weight (static int power -> square&mul).
    @pl.when(pl.program_id(0) == 0)
    def _():
        w = jnp.maximum(weight_ref[...], 0.0)
        wgate_ref[...] = w ** pow_weight

    # Column-normalized center: (center + bias) * rsqrt(colsumsq + eps).
    c = center_ref[...] + bias_ref[...]                       # [D_pad, TN]
    inv = jax.lax.rsqrt(jnp.sum(c * c, axis=0, keepdims=True) + _EPS)
    cnorm_ref[...] = (c * inv).astype(cnorm_ref.dtype)

    # beta folded into the scale vector: beta * relu(scale)**3.
    s = jnp.maximum(scale_ref[...], 0.0)                      # [1, TN]
    sbeta_ref[...] = beta * s * s * s


# --------------------------------------------------------------------------
# Hot kernel: grid = (batch tiles, N tiles);  out is the accumulator.
# --------------------------------------------------------------------------
def _image_adapter_kernel(x_ref, wgate_ref, cnorm_ref, sbeta_ref, cv_ref,
                          out_ref, xn_ref, *, beta):
    j = pl.program_id(1)

    @pl.when(j == 0)
    def _():
        # Gate + L2 row-normalize x once per batch tile (reused for all N tiles).
        xg = x_ref[...] * wgate_ref[...]                      # [TB, D_pad] f32
        inv = jax.lax.rsqrt(jnp.sum(xg * xg, axis=-1, keepdims=True) + _EPS)
        xn_ref[...] = (xg * inv).astype(xn_ref.dtype)         # bf16 for MXU
        out_ref[...] = jnp.zeros_like(out_ref)

    # Affinity block: [TB, TN] (MXU, bf16 inputs, f32 accumulate).
    aff = jnp.dot(xn_ref[...], cnorm_ref[...],
                  preferred_element_type=jnp.float32)
    # exp(beta*scale^3 * aff - beta): one VPU mul + EUP exp.
    p = jnp.exp(aff * sbeta_ref[...] - beta)
    # Accumulate class logits (lane-dense C_pad columns).
    out_ref[...] += jnp.dot(p, cv_ref[...],
                            preferred_element_type=jnp.float32)


# --------------------------------------------------------------------------
# Wrappers.
# --------------------------------------------------------------------------
def image_adapter_prepare(weight, cache_keys, center_bias, scale, cache_values,
                          beta=5.0, pow_weight=20, mxu_dtype=jnp.bfloat16):
    """Run once per parameter set; returns padded, pre-processed tensors."""
    D, N = cache_keys.shape
    Nc, C = cache_values.shape
    assert Nc == N and weight.shape == (D,) and scale.shape == (N,)
    assert center_bias.shape == (D, N)

    D_pad = _round_up(D, 128)
    N_pad = _round_up(N, 128)
    C_pad = _round_up(C, 128)
    TN = 128
    for cand in (1024, 512, 256, 128):
        if cand <= N_pad and N_pad % cand == 0:
            TN = cand
            break

    w2 = _pad2(weight.reshape(1, D).astype(jnp.float32), (1, D_pad))
    ck = _pad2(cache_keys.astype(jnp.float32), (D_pad, N_pad))
    cb = _pad2(center_bias.astype(jnp.float32), (D_pad, N_pad))
    sc = _pad2(scale.reshape(1, N).astype(jnp.float32), (1, N_pad))
    cv = _pad2(cache_values.astype(jnp.float32), (N_pad, C_pad))

    kernel = functools.partial(_param_prep_kernel,
                               beta=float(beta), pow_weight=int(pow_weight))
    w_gate, center_norm, s_beta = pl.pallas_call(
        kernel,
        out_shape=(jax.ShapeDtypeStruct((1, D_pad), jnp.float32),
                   jax.ShapeDtypeStruct((D_pad, N_pad), mxu_dtype),
                   jax.ShapeDtypeStruct((1, N_pad), jnp.float32)),
        grid=(N_pad // TN,),
        in_specs=[pl.BlockSpec((1, D_pad), lambda j: (0, 0)),
                  pl.BlockSpec((D_pad, TN), lambda j: (0, j)),
                  pl.BlockSpec((D_pad, TN), lambda j: (0, j)),
                  pl.BlockSpec((1, TN), lambda j: (0, j))],
        out_specs=(pl.BlockSpec((1, D_pad), lambda j: (0, 0)),
                   pl.BlockSpec((D_pad, TN), lambda j: (0, j)),
                   pl.BlockSpec((1, TN), lambda j: (0, j))),
        compiler_params=pltpu.CompilerParams(
            dimension_semantics=("arbitrary",),
            vmem_limit_bytes=48 * 1024 * 1024),
    )(w2, ck, cb, sc)

    return dict(w_gate=w_gate, center_norm=center_norm, s_beta=s_beta,
                cache_values=cv, beta=float(beta), num_classes=C,
                tile_n=TN, mxu_dtype=mxu_dtype)


def image_adapter_apply(x, params, tile_b=256):
    """Hot path: per-call forward using pre-processed parameters."""
    w_gate = params["w_gate"]
    cnorm = params["center_norm"]
    sbeta = params["s_beta"]
    cv = params["cache_values"]
    beta = params["beta"]
    C = params["num_classes"]
    TN = params["tile_n"]

    B, D = x.shape
    D_pad, N_pad = cnorm.shape
    C_pad = cv.shape[1]
    assert D <= D_pad

    B8 = _round_up(B, 8)
    TB = min(tile_b, B8)
    B_pad = _round_up(B, TB)

    x_p = _pad2(x.astype(jnp.float32), (B_pad, D_pad))

    grid = (B_pad // TB, N_pad // TN)
    cost = pl.CostEstimate(
        flops=2 * B_pad * D_pad * N_pad + 2 * B_pad * N_pad * C_pad,
        transcendentals=B_pad * N_pad + B_pad,
        bytes_accessed=int(x_p.nbytes + w_gate.nbytes + cnorm.nbytes
                           + sbeta.nbytes + cv.nbytes + B_pad * C_pad * 4))

    kernel = functools.partial(_image_adapter_kernel, beta=float(beta))
    out = pl.pallas_call(
        kernel,
        out_shape=jax.ShapeDtypeStruct((B_pad, C_pad), jnp.float32),
        grid=grid,
        in_specs=[pl.BlockSpec((TB, D_pad), lambda i, j: (i, 0)),
                  pl.BlockSpec((1, D_pad), lambda i, j: (0, 0)),
                  pl.BlockSpec((D_pad, TN), lambda i, j: (0, j)),
                  pl.BlockSpec((1, TN), lambda i, j: (0, j)),
                  pl.BlockSpec((TN, C_pad), lambda i, j: (j, 0))],
        out_specs=pl.BlockSpec((TB, C_pad), lambda i, j: (i, 0)),
        scratch_shapes=[pltpu.VMEM((TB, D_pad), params["mxu_dtype"])],
        compiler_params=pltpu.CompilerParams(
            dimension_semantics=("parallel", "arbitrary"),
            vmem_limit_bytes=48 * 1024 * 1024),
        cost_estimate=cost,
    )(x_p, w_gate, cnorm, sbeta, cv)

    return out[:B, :C]


def image_adapter_forward(x, weight, cache_keys, center_bias, scale,
                          cache_values, beta=5.0, pow_weight=20,
                          mxu_dtype=jnp.bfloat16):
    params = image_adapter_prepare(weight, cache_keys, center_bias, scale,
                                   cache_values, beta=beta,
                                   pow_weight=pow_weight, mxu_dtype=mxu_dtype)
    return image_adapter_apply(x, params)


def image_adapter_reference(x, weight, cache_keys, center_bias, scale,
                            cache_values, beta=5.0, pow_weight=20):
    """Pure-JAX mirror of the PyTorch eval forward, for verification."""
    x = x * jnp.maximum(weight, 0.0) ** pow_weight
    x = x / jnp.linalg.norm(x, axis=-1, keepdims=True)
    center = cache_keys + center_bias
    center = center / jnp.linalg.norm(center, axis=0, keepdims=True)
    x = x @ center
    x = x * jnp.maximum(scale, 0.0) ** 3
    x = jnp.exp(beta * x - beta)
    return x @ cache_values


if __name__ == "__main__":
    # num_cluster = 16, num_cls = 2  ->  N = 32;  D = 32, B = 8, C = 2
    key = jax.random.PRNGKey(0)
    k_x, k_keys, k_bias, k_w, k_s = jax.random.split(key, 5)

    B, D = 8, 32
    num_cluster, num_cls = 16, 2
    N = num_cluster * num_cls
    C = num_cls

    x = jax.random.normal(k_x, (B, D), dtype=jnp.float32)
    cache_keys = jax.random.normal(k_keys, (D, N), dtype=jnp.float32)
    center_bias = 0.01 * jax.random.normal(k_bias, (D, N), dtype=jnp.float32)
    weight = jnp.ones((D,), jnp.float32) + \
        0.05 * jax.random.normal(k_w, (D,), jnp.float32)
    scale = jnp.ones((N,), jnp.float32) + \
        0.05 * jax.random.normal(k_s, (N,), jnp.float32)
    labels = jnp.arange(N) // num_cluster
    cache_values = jax.nn.one_hot(labels, C, dtype=jnp.float32)   # [N, C]
    beta = 5.0

    ref = jax.block_until_ready(image_adapter_reference(
        x, weight, cache_keys, center_bias, scale, cache_values,
        beta=beta, pow_weight=20))

    # f32 MXU path: tight check.
    out_f32 = jax.block_until_ready(image_adapter_forward(
        x, weight, cache_keys, center_bias, scale, cache_values,
        beta=beta, pow_weight=20, mxu_dtype=jnp.float32))
    assert out_f32.shape == (B, C), out_f32.shape
    assert jnp.allclose(out_f32, ref, rtol=1e-3, atol=1e-4), (out_f32, ref)

    # Default bf16-MXU fast path (v5e/v6e/v7x): looser check (bf16 operands).
    out_bf16 = jax.block_until_ready(image_adapter_forward(
        x, weight, cache_keys, center_bias, scale, cache_values,
        beta=beta, pow_weight=20, mxu_dtype=jnp.bfloat16))
    assert out_bf16.shape == (B, C), out_bf16.shape
    assert jnp.allclose(out_bf16, ref, rtol=5e-2, atol=1e-3), (out_bf16, ref)

    print("KERNEL_OK")
</pallas_src>

<mosaic_0001>
module attributes {stable_mosaic.version = 11 : i64} {
  func.func @_param_prep_kernel(%arg0: i32, %arg1: memref<1x128xf32, #tpu.memory_space<vmem>>, %arg2: memref<128x128xf32, #tpu.memory_space<vmem>>, %arg3: memref<128x128xf32, #tpu.memory_space<vmem>>, %arg4: memref<1x128xf32, #tpu.memory_space<vmem>>, %arg5: memref<1x128xf32, #tpu.memory_space<vmem>>, %arg6: memref<128x128xf32, #tpu.memory_space<vmem>>, %arg7: memref<1x128xf32, #tpu.memory_space<vmem>>) attributes {dimension_semantics = [#tpu.dimension_semantics<arbitrary>], iteration_bounds = array<i64: 1>, scalar_prefetch = 0 : i64, scratch_operands = 0 : i64, tpu.core_type = #tpu.core_type<tc>, window_params = [{pipeline_mode = #tpu.pipeline_mode<synchronous>, transform_indices = @transform_0, window_bounds = array<i64: 1, 128>}, {transform_indices = @transform_1, window_bounds = array<i64: 128, 128>}, {transform_indices = @transform_2, window_bounds = array<i64: 128, 128>}, {transform_indices = @transform_3, window_bounds = array<i64: 1, 128>}, {pipeline_mode = #tpu.pipeline_mode<synchronous>, transform_indices = @transform_4, window_bounds = array<i64: 1, 128>}, {transform_indices = @transform_5, window_bounds = array<i64: 128, 128>}, {transform_indices = @transform_6, window_bounds = array<i64: 1, 128>}]} {
    %c0_i32 = arith.constant 0 : i32
    %0 = arith.cmpi eq, %arg0, %c0_i32 : i32
    %1 = arith.extui %0 : i1 to i32
    %c0_i32_0 = arith.constant 0 : i32
    %2 = arith.cmpi ne, %1, %c0_i32_0 : i32
    scf.if %2 {
      %c0_13 = arith.constant 0 : index
      %c0_14 = arith.constant 0 : index
      %23 = vector.load %arg1[%c0_13, %c0_14] : memref<1x128xf32, #tpu.memory_space<vmem>>, vector<1x128xf32>
      %cst_15 = arith.constant 0.000000e+00 : f32
      %24 = vector.broadcast %cst_15 : f32 to vector<1x128xf32>
      %25 = arith.maximumf %23, %24 : vector<1x128xf32>
      %26 = arith.mulf %25, %25 : vector<1x128xf32>
      %27 = arith.mulf %26, %26 : vector<1x128xf32>
      %28 = arith.mulf %27, %27 : vector<1x128xf32>
      %29 = arith.mulf %28, %28 : vector<1x128xf32>
      %30 = arith.mulf %27, %29 : vector<1x128xf32>
      %c0_16 = arith.constant 0 : index
      %c0_17 = arith.constant 0 : index
      %31 = vector.load %arg5[%c0_16, %c0_17] : memref<1x128xf32, #tpu.memory_space<vmem>>, vector<1x128xf32>
      tpu.vector_store %arg5[%c0_16, %c0_17], %30 {strides = array<i32>} : memref<1x128xf32, #tpu.memory_space<vmem>>, vector<1x128xf32>,
    } else {
    }
    %c0 = arith.constant 0 : index
    %c0_1 = arith.constant 0 : index
    %3 = vector.load %arg2[%c0, %c0_1] : memref<128x128xf32, #tpu.memory_space<vmem>>, vector<128x128xf32>
    %c0_2 = arith.constant 0 : index
    %c0_3 = arith.constant 0 : index
    %4 = vector.load %arg3[%c0_2, %c0_3] : memref<128x128xf32, #tpu.memory_space<vmem>>, vector<128x128xf32>
    %5 = arith.addf %3, %4 : vector<128x128xf32>
    %6 = arith.mulf %5, %5 : vector<128x128xf32>
    %cst = arith.constant dense<0.000000e+00> : vector<128xf32>
    %7 = vector.multi_reduction <add>, %6, %cst [0] : vector<128x128xf32> to vector<128xf32>
    %8 = vector.shape_cast %7 : vector<128xf32> to vector<1x128xf32>
    %cst_4 = arith.constant 9.99999996E-13 : f32
    %9 = vector.broadcast %cst_4 : f32 to vector<1x128xf32>
    %10 = arith.addf %8, %9 : vector<1x128xf32>
    %11 = math.rsqrt %10 : vector<1x128xf32>
    %12 = vector.broadcast %11 : vector<1x128xf32> to vector<128x128xf32>
    %13 = arith.mulf %5, %12 : vector<128x128xf32>
    %c0_5 = arith.constant 0 : index
    %c0_6 = arith.constant 0 : index
    %14 = vector.load %arg6[%c0_5, %c0_6] : memref<128x128xf32, #tpu.memory_space<vmem>>, vector<128x128xf32>
    tpu.vector_store %arg6[%c0_5, %c0_6], %13 {strides = array<i32>} : memref<128x128xf32, #tpu.memory_space<vmem>>, vector<128x128xf32>,
    %c0_7 = arith.constant 0 : index
    %c0_8 = arith.constant 0 : index
    %15 = vector.load %arg4[%c0_7, %c0_8] : memref<1x128xf32, #tpu.memory_space<vmem>>, vector<1x128xf32>
    %cst_9 = arith.constant 0.000000e+00 : f32
    %16 = vector.broadcast %cst_9 : f32 to vector<1x128xf32>
    %17 = arith.maximumf %15, %16 : vector<1x128xf32>
    %cst_10 = arith.constant 5.000000e+00 : f32
    %18 = vector.broadcast %cst_10 : f32 to vector<1x128xf32>
    %19 = arith.mulf %18, %17 : vector<1x128xf32>
    %20 = arith.mulf %19, %17 : vector<1x128xf32>
    %21 = arith.mulf %20, %17 : vector<1x128xf32>
    %c0_11 = arith.constant 0 : index
    %c0_12 = arith.constant 0 : index
    %22 = vector.load %arg7[%c0_11, %c0_12] : memref<1x128xf32, #tpu.memory_space<vmem>>, vector<1x128xf32>
    tpu.vector_store %arg7[%c0_11, %c0_12], %21 {strides = array<i32>} : memref<1x128xf32, #tpu.memory_space<vmem>>, vector<1x128xf32>,
    return
  }
  func.func @transform_0(%arg0: i32) -> (i32, i32) {
    %c0_i32 = arith.constant 0 : i32
    %c0_i32_0 = arith.constant 0 : i32
    %c0_i32_1 = arith.constant 0 : i32
    return %c0_i32, %c0_i32_0 : i32, i32
  }
  func.func @transform_1(%arg0: i32) -> (i32, i32) {
    %c0_i32 = arith.constant 0 : i32
    %c0_i32_0 = arith.constant 0 : i32
    return %c0_i32, %arg0 : i32, i32
  }
  func.func @transform_2(%arg0: i32) -> (i32, i32) {
    %c0_i32 = arith.constant 0 : i32
    %c0_i32_0 = arith.constant 0 : i32
    return %c0_i32, %arg0 : i32, i32
  }
  func.func @transform_3(%arg0: i32) -> (i32, i32) {
    %c0_i32 = arith.constant 0 : i32
    %c0_i32_0 = arith.constant 0 : i32
    return %c0_i32, %arg0 : i32, i32
  }
  func.func @transform_4(%arg0: i32) -> (i32, i32) {
    %c0_i32 = arith.constant 0 : i32
    %c0_i32_0 = arith.constant 0 : i32
    %c0_i32_1 = arith.constant 0 : i32
    return %c0_i32, %c0_i32_0 : i32, i32
  }
  func.func @transform_5(%arg0: i32) -> (i32, i32) {
    %c0_i32 = arith.constant 0 : i32
    %c0_i32_0 = arith.constant 0 : i32
    return %c0_i32, %arg0 : i32, i32
  }
  func.func @transform_6(%arg0: i32) -> (i32, i32) {
    %c0_i32 = arith.constant 0 : i32
    %c0_i32_0 = arith.constant 0 : i32
    return %c0_i32, %arg0 : i32, i32
  }
}

</mosaic_0001>

<llo_original>
// kernel: tpu_custom_call.1
$region0: #{tpu_custom_call.1}
  #allocation0 [shape = 'u32[]', space=smem, size = 0x4, offset = 0x4, fixed_abs, tag = 'smem constant byte address 0x4 - core index']
  #allocation1 [shape = 'u32[72,128]{1,0:T(1,128)}', space=vmem, size = 0x9000, scoped, tag = 'internal scratch']
  %s0 = inlined_call_operand.hbm [shape: f32[1,128], index: 0, kind: input, shape index: {}]
  %s1 = inlined_call_operand.hbm [shape: f32[128,128], index: 1, kind: input, shape index: {}]
  %s2 = inlined_call_operand.hbm [shape: f32[128,128], index: 2, kind: input, shape index: {}]
  %s3 = inlined_call_operand.vmem [shape: f32[1,128], index: 3, kind: input, shape index: {}]
  %s4 = inlined_call_operand.hbm [shape: f32[1,128], index: 4, kind: output, shape index: {0}]
  %s5 = inlined_call_operand.hbm [shape: f32[128,128], index: 5, kind: output, shape index: {1}]
  %s6 = inlined_call_operand.hbm [shape: f32[1,128], index: 6, kind: output, shape index: {2}]
  %7 = xla_tuple %s4, %s5, %s6
  %s8 = sld [smem:[#allocation0]]
  $region58: #{tpu_custom_call.1} parent=0
    _
  %s10 = ssub.s32 1, %s8
  %s11 = scalar_select 0, %s10, %s8
  $region1: #{tpu_custom_call.1} parent=0
    #allocation2 [shape = 'u8[512]{0}', space=vmem, size = 0x400, scoped, tag = 'input window, operand 0, single buffered']
    #allocation3 [shape = 's32[1]{0}', space=sflag, size = 0x4, scoped, tag = 'scoped memory for tpu_custom_call.1']
    #allocation4 [shape = 's32[1]{0}', space=sflag, size = 0x4, scoped, tag = 'scoped memory for tpu_custom_call.1']
    #allocation5 [shape = 'u8[65536]{0}', space=vmem, size = 0x10000, scoped, tag = 'input window, operand 1, single buffered']
    #allocation6 [shape = 's32[1]{0}', space=sflag, size = 0x4, scoped, tag = 'scoped memory for tpu_custom_call.1']
    #allocation7 [shape = 'u8[65536]{0}', space=vmem, size = 0x10000, scoped, tag = 'input window, operand 2, single buffered']
    #allocation8 [shape = 'u8[512]{0}', space=vmem, size = 0x400, scoped, tag = 'output window, operand 0, single buffered']
    #allocation9 [shape = 'u8[65536]{0}', space=vmem, size = 0x10000, scoped, tag = 'output window, operand 1, single buffered']
    #allocation10 [shape = 's32[1]{0}', space=sflag, size = 0x4, scoped, tag = 'scoped memory for tpu_custom_call.1']
    #allocation11 [shape = 'u8[512]{0}', space=vmem, size = 0x400, scoped, tag = 'output window, operand 2, single buffered']
    %12 = vsyncpa [#allocation3], 0
    %13 = vsyncpa [#allocation6], 0
    %14 = vsyncpa [#allocation4], 0
    %15 = vsyncpa [#allocation10], 0
    // Predicated region
    $region2: #{tpu_custom_call.1} parent=1 // pred_check
      _
    $region3: #{tpu_custom_call.1} parent=1 // pred_check_branch
      %17 = sbr.rel (0) target = $region5
    $region4: #{tpu_custom_call.1} parent=1 // pred_region
      %19 = vsyncadd [#allocation3], 0
      %s21 = sshll.u32 %s0, 4
      %s22 = int_to_ptr.hbm [resolvable:$true] %s21
      %s23 = sshll.u32 [#allocation2], 4
      %s24 = int_to_ptr.vmem [resolvable:$true] %s23
      %26 = dma.hbm_to_vmem [thread:$0]  %s22, 16, %s24, [#allocation3]
    $region5: #{tpu_custom_call.1} parent=1 // pred_fallthru
      _
    // Predicated region
    $region6: #{tpu_custom_call.1} parent=1 // pred_check
      _
    $region7: #{tpu_custom_call.1} parent=1 // pred_check_branch
      %28 = sbr.rel (0) target = $region9
    $region8: #{tpu_custom_call.1} parent=1 // pred_region
      %30 = vsyncadd [#allocation6], 0
      %s31 = sshll.u32 %s1, 4
      %s32 = int_to_ptr.hbm [resolvable:$true] %s31
      %s33 = sshll.u32 [#allocation5], 4
      %s34 = int_to_ptr.vmem [resolvable:$true] %s33
      %39 = dma.hbm_to_vmem [thread:$0]  %s32, 2048, %s34, [#allocation6], 128, 128, 8
    $region9: #{tpu_custom_call.1} parent=1 // pred_fallthru
      _
    // Predicated region
    $region10: #{tpu_custom_call.1} parent=1 // pred_check
      _
    $region11: #{tpu_custom_call.1} parent=1 // pred_check_branch
      %41 = sbr.rel (0) target = $region13
    $region12: #{tpu_custom_call.1} parent=1 // pred_region
      %43 = vsyncadd [#allocation6], 0
      %s44 = sshll.u32 %s2, 4
      %s45 = int_to_ptr.hbm [resolvable:$true] %s44
      %s46 = sshll.u32 [#allocation7], 4
      %s47 = int_to_ptr.vmem [resolvable:$true] %s46
      %52 = dma.hbm_to_vmem [thread:$0]  %s45, 2048, %s47, [#allocation6], 128, 128, 8
    $region13: #{tpu_custom_call.1} parent=1 // pred_fallthru
      _
    // Predicated region
    $region14: #{tpu_custom_call.1} parent=1 // pred_check
      _
    $region15: #{tpu_custom_call.1} parent=1 // pred_check_branch
      %54 = sbr.rel (0) target = $region17
    $region16: #{tpu_custom_call.1} parent=1 // pred_region
      _
    $region17: #{tpu_custom_call.1} parent=1 // pred_fallthru
      _
    // Predicated region
    $region18: #{tpu_custom_call.1} parent=1 // pred_check
      _
    $region19: #{tpu_custom_call.1} parent=1 // pred_check_branch
      %56 = sbr.rel (0) target = $region21
    $region20: #{tpu_custom_call.1} parent=1 // pred_region
      %58 = dma.done [#allocation3], 16
    $region21: #{tpu_custom_call.1} parent=1 // pred_fallthru
      _
    // Predicated region
    $region22: #{tpu_custom_call.1} parent=1 // pred_check
      _
    $region23: #{tpu_custom_call.1} parent=1 // pred_check_branch
      %60 = sbr.rel (0) target = $region25
    $region24: #{tpu_custom_call.1} parent=1 // pred_region
      %62 = dma.done [#allocation6], 2048
    $region25: #{tpu_custom_call.1} parent=1 // pred_fallthru
      _
    // Predicated region
    $region26: #{tpu_custom_call.1} parent=1 // pred_check
      _
    $region27: #{tpu_custom_call.1} parent=1 // pred_check_branch
      %64 = sbr.rel (0) target = $region29
    $region28: #{tpu_custom_call.1} parent=1 // pred_region
      %66 = dma.done [#allocation6], 2048
    $region29: #{tpu_custom_call.1} parent=1 // pred_fallthru
      _
    %p67 = scmp.eq.s32.totalorder 0, 0
    // Predicated region
    $region30: #{tpu_custom_call.1} parent=1 // pred_check
      %p68 = pneg %p67
    $region31: #{tpu_custom_call.1} parent=1 // pred_check_branch
      %70 = sbr.rel (%p68) target = $region33
    $region32: #{tpu_custom_call.1} parent=1 // pred_region
      %v71 = vld [vmem:[#allocation2] sm:$0x1]
      %v72 = vmax.f32 %v71, 0.0
      %v73 = vmul.f32 %v72, %v72
      %v74 = vmul.f32 %v73, %v73
      %v75 = vmul.f32 %v74, %v74
      %v76 = vmul.f32 %v75, %v75
      %v77 = vmul.f32 %v74, %v76
      %78 = vst [vmem:[#allocation8] sm:$0x1] %v77
    $region33: #{tpu_custom_call.1} parent=1 // pred_fallthru
      _
    %v79 = vld [vmem:[#allocation5] sm:$0xff]
    %v80 = vld [vmem:[#allocation5 + $0x8] sm:$0xff]
    %v81 = vld [vmem:[#allocation5 + $0x10] sm:$0xff]
    %v82 = vld [vmem:[#allocation5 + $0x18] sm:$0xff]
    %v83 = vld [vmem:[#allocation5 + $0x20] sm:$0xff]
    %v84 = vld [vmem:[#allocation5 + $0x28] sm:$0xff]
    %v85 = vld [vmem:[#allocation5 + $0x30] sm:$0xff]
    %v86 = vld [vmem:[#allocation5 + $0x38] sm:$0xff]
    %v87 = vld [vmem:[#allocation5 + $0x40] sm:$0xff]
    %v88 = vld [vmem:[#allocation5 + $0x48] sm:$0xff]
    %v89 = vld [vmem:[#allocation5 + $0x50] sm:$0xff]
    %v90 = vld [vmem:[#allocation5 + $0x58] sm:$0xff]
    %v91 = vld [vmem:[#allocation5 + $0x60] sm:$0xff]
    %v92 = vld [vmem:[#allocation5 + $0x68] sm:$0xff]
    %v93 = vld [vmem:[#allocation5 + $0x70] sm:$0xff]
    %v94 = vld [vmem:[#allocation5 + $0x78] sm:$0xff]
    %v95 = vld [vmem:[#allocation7] sm:$0xff]
    %v96 = vld [vmem:[#allocation7 + $0x8] sm:$0xff]
    %v97 = vld [vmem:[#allocation7 + $0x10] sm:$0xff]
    %v98 = vld [vmem:[#allocation7 + $0x18] sm:$0xff]
    %v99 = vld [vmem:[#allocation7 + $0x20] sm:$0xff]
    %v100 = vld [vmem:[#allocation7 + $0x28] sm:$0xff]
    %v101 = vld [vmem:[#allocation7 + $0x30] sm:$0xff]
    %v102 = vld [vmem:[#allocation7 + $0x38] sm:$0xff]
    %v103 = vld [vmem:[#allocation7 + $0x40] sm:$0xff]
    %v104 = vld [vmem:[#allocation7 + $0x48] sm:$0xff]
    %v105 = vld [vmem:[#allocation7 + $0x50] sm:$0xff]
    %v106 = vld [vmem:[#allocation7 + $0x58] sm:$0xff]
    %v107 = vld [vmem:[#allocation7 + $0x60] sm:$0xff]
    %v108 = vld [vmem:[#allocation7 + $0x68] sm:$0xff]
    %v109 = vld [vmem:[#allocation7 + $0x70] sm:$0xff]
    %v110 = vld [vmem:[#allocation7 + $0x78] sm:$0xff]
    %v111 = vadd.f32 %v79, %v95
    %v112 = vadd.f32 %v80, %v96
    %v113 = vadd.f32 %v81, %v97
    %v114 = vadd.f32 %v82, %v98
    %v115 = vadd.f32 %v83, %v99
    %v116 = vadd.f32 %v84, %v100
    %v117 = vadd.f32 %v85, %v101
    %v118 = vadd.f32 %v86, %v102
    %v119 = vadd.f32 %v87, %v103
    %v120 = vadd.f32 %v88, %v104
    %v121 = vadd.f32 %v89, %v105
    %v122 = vadd.f32 %v90, %v106
    %v123 = vadd.f32 %v91, %v107
    %v124 = vadd.f32 %v92, %v108
    %v125 = vadd.f32 %v93, %v109
    %v126 = vadd.f32 %v94, %v110
    %v127 = vmul.f32 %v111, %v111
    %v128 = vmul.f32 %v112, %v112
    %v129 = vmul.f32 %v113, %v113
    %v130 = vmul.f32 %v114, %v114
    %v131 = vmul.f32 %v115, %v115
    %v132 = vmul.f32 %v116, %v116
    %v133 = vmul.f32 %v117, %v117
    %v134 = vmul.f32 %v118, %v118
    %v135 = vmul.f32 %v119, %v119
    %v136 = vmul.f32 %v120, %v120
    %v137 = vmul.f32 %v121, %v121
    %v138 = vmul.f32 %v122, %v122
    %v139 = vmul.f32 %v123, %v123
    %v140 = vmul.f32 %v124, %v124
    %v141 = vmul.f32 %v125, %v125
    %v142 = vmul.f32 %v126, %v126
    %v143 = vadd.f32 %v127, %v128
    %v144 = vadd.f32 %v143, %v129
    %v145 = vadd.f32 %v144, %v130
    %v146 = vadd.f32 %v145, %v131
    %v147 = vadd.f32 %v146, %v132
    %v148 = vadd.f32 %v147, %v133
    %v149 = vadd.f32 %v148, %v134
    %v150 = vadd.f32 %v149, %v135
    %v151 = vadd.f32 %v150, %v136
    %v152 = vadd.f32 %v151, %v137
    %v153 = vadd.f32 %v152, %v138
    %v154 = vadd.f32 %v153, %v139
    %v155 = vadd.f32 %v154, %v140
    %v156 = vadd.f32 %v155, %v141
    %v157 = vadd.f32 %v156, %v142
    %v158 = vrot.slane %v157, 4
    %v159 = vadd.f32 %v157, %v158
    %v160 = vrot.slane %v159, 2
    %v161 = vadd.f32 %v159, %v160
    %v162 = vrot.slane %v161, 1
    %v163 = vadd.f32 %v161, %v162
    %v164 = vadd.f32 %v163, 1e-12
    %v165 = vrsqrt.pop %v164
    %v166 = vmul.f32 %v165, %v164
    %v167 = vmul.f32 %v166, %v165
    %v168 = vmul.f32 0.5, %v167
    %v169 = vsub.f32 1.5, %v168
    %v170 = vmul.f32 %v165, %v169
    %vm171 = vweird.f32 %v164
    %vm172 = vweird.f32 %v165
    %vm173 = vmor %vm171, %vm172
    %v174 = vsel %vm173, %v165, %v170
    %v175 = vmul.f32 %v111, %v174
    %v176 = vmul.f32 %v112, %v174
    %v177 = vmul.f32 %v113, %v174
    %v178 = vmul.f32 %v114, %v174
    %v179 = vmul.f32 %v115, %v174
    %v180 = vmul.f32 %v116, %v174
    %v181 = vmul.f32 %v117, %v174
    %v182 = vmul.f32 %v118, %v174
    %v183 = vmul.f32 %v119, %v174
    %v184 = vmul.f32 %v120, %v174
    %v185 = vmul.f32 %v121, %v174
    %v186 = vmul.f32 %v122, %v174
    %v187 = vmul.f32 %v123, %v174
    %v188 = vmul.f32 %v124, %v174
    %v189 = vmul.f32 %v125, %v174
    %v190 = vmul.f32 %v126, %v174
    %191 = vst [vmem:[#allocation9] sm:$0xff] %v175
    %192 = vst [vmem:[#allocation9 + $0x8] sm:$0xff] %v176
    %193 = vst [vmem:[#allocation9 + $0x10] sm:$0xff] %v177
    %194 = vst [vmem:[#allocation9 + $0x18] sm:$0xff] %v178
    %195 = vst [vmem:[#allocation9 + $0x20] sm:$0xff] %v179
    %196 = vst [vmem:[#allocation9 + $0x28] sm:$0xff] %v180
    %197 = vst [vmem:[#allocation9 + $0x30] sm:$0xff] %v181
    %198 = vst [vmem:[#allocation9 + $0x38] sm:$0xff] %v182
    %199 = vst [vmem:[#allocation9 + $0x40] sm:$0xff] %v183
    %200 = vst [vmem:[#allocation9 + $0x48] sm:$0xff] %v184
    %201 = vst [vmem:[#allocation9 + $0x50] sm:$0xff] %v185
    %202 = vst [vmem:[#allocation9 + $0x58] sm:$0xff] %v186
    %203 = vst [vmem:[#allocation9 + $0x60] sm:$0xff] %v187
    %204 = vst [vmem:[#allocation9 + $0x68] sm:$0xff] %v188
    %205 = vst [vmem:[#allocation9 + $0x70] sm:$0xff] %v189
    %206 = vst [vmem:[#allocation9 + $0x78] sm:$0xff] %v190
    %v207 = vld [vmem:[%s3] sm:$0x1]
    %v208 = vmax.f32 %v207, 0.0
    %v209 = vmul.f32 %v208, 5.0
    %v210 = vmul.f32 %v209, %v208
    %v211 = vmul.f32 %v210, %v208
    %212 = vst [vmem:[#allocation11] sm:$0x1] %v211
    // Predicated region
    $region34: #{tpu_custom_call.1} parent=1 // pred_check
      _
    $region35: #{tpu_custom_call.1} parent=1 // pred_check_branch
      %214 = sbr.rel (0) target = $region37
    $region36: #{tpu_custom_call.1} parent=1 // pred_region
      %216 = vsyncadd [#allocation4], 0
      %s218 = sshll.u32 [#allocation8], 4
      %s219 = int_to_ptr.vmem [resolvable:$true] %s218
      %s220 = sshll.u32 %s4, 4
      %s221 = int_to_ptr.hbm [resolvable:$true] %s220
      %223 = dma.vmem_to_hbm [thread:$0]  %s219, 16, %s221, [#allocation4]
    $region37: #{tpu_custom_call.1} parent=1 // pred_fallthru
      _
    // Predicated region
    $region38: #{tpu_custom_call.1} parent=1 // pred_check
      _
    $region39: #{tpu_custom_call.1} parent=1 // pred_check_branch
      %225 = sbr.rel (0) target = $region41
    $region40: #{tpu_custom_call.1} parent=1 // pred_region
      %227 = vsyncadd [#allocation10], 0
      %s228 = sshll.u32 [#allocation9], 4
      %s229 = int_to_ptr.vmem [resolvable:$true] %s228
      %s230 = sshll.u32 %s5, 4
      %s231 = int_to_ptr.hbm [resolvable:$true] %s230
      %236 = dma.vmem_to_hbm [thread:$0]  %s229, 2048, %s231, [#allocation10], 128, 128, 8
    $region41: #{tpu_custom_call.1} parent=1 // pred_fallthru
      _
    // Predicated region
    $region42: #{tpu_custom_call.1} parent=1 // pred_check
      _
    $region43: #{tpu_custom_call.1} parent=1 // pred_check_branch
      %238 = sbr.rel (0) target = $region45
    $region44: #{tpu_custom_call.1} parent=1 // pred_region
      %240 = vsyncadd [#allocation10], 0
      %s242 = sshll.u32 [#allocation11], 4
      %s243 = int_to_ptr.vmem [resolvable:$true] %s242
      %s244 = sshll.u32 %s6, 4
      %s245 = int_to_ptr.hbm [resolvable:$true] %s244
      %247 = dma.vmem_to_hbm [thread:$0]  %s243, 16, %s245, [#allocation10]
    $region45: #{tpu_custom_call.1} parent=1 // pred_fallthru
      _
    // Predicated region
    $region46: #{tpu_custom_call.1} parent=1 // pred_check
      _
    $region47: #{tpu_custom_call.1} parent=1 // pred_check_branch
      %249 = sbr.rel (0) target = $region49
    $region48: #{tpu_custom_call.1} parent=1 // pred_region
      %251 = dma.done [#allocation4], 16
    $region49: #{tpu_custom_call.1} parent=1 // pred_fallthru
      _
    // Predicated region
    $region50: #{tpu_custom_call.1} parent=1 // pred_check
      _
    $region51: #{tpu_custom_call.1} parent=1 // pred_check_branch
      %253 = sbr.rel (0) target = $region53
    $region52: #{tpu_custom_call.1} parent=1 // pred_region
      %255 = dma.done [#allocation10], 2048
    $region53: #{tpu_custom_call.1} parent=1 // pred_fallthru
      _
    // Predicated region
    $region54: #{tpu_custom_call.1} parent=1 // pred_check
      _
    $region55: #{tpu_custom_call.1} parent=1 // pred_check_branch
      %257 = sbr.rel (0) target = $region57
    $region56: #{tpu_custom_call.1} parent=1 // pred_region
      %259 = dma.done [#allocation10], 16
    $region57: #{tpu_custom_call.1} parent=1 // pred_fallthru
      _
    %260 = vsyncpa [#allocation3], 1
    %261 = vsyncpa [#allocation6], 1
    %262 = vsyncpa [#allocation4], 1
    %263 = vsyncpa [#allocation10], 1

</llo_original>
